<compile_context>
chip_gen: v6e
topology: v6e:2x2x1
jax: 0.10.0
libtpu: 0.0.40
codegen_flags: <defaults>
</compile_context>

<pallas_src>
import math

import numpy as np
import jax
import jax.numpy as jnp
from jax.experimental import pallas as pl
from jax.experimental.pallas import tpu as pltpu

_INV_SQRT2 = 1.0 / math.sqrt(2.0)


# ----------------------------- kernels --------------------------------------


def _gelu_exact(h):
    # Exact (erf-based) GELU in f32 -- matches torch.nn.GELU() default.
    return 0.5 * h * (1.0 + jax.lax.erf(h * _INV_SQRT2))


def _mlp_kernel_acc(x_ref, w1_ref, b1_ref, w2_ref, b2_ref, o_ref, acc_ref):
    """One (tm, C_out) output tile; grid axis 1 reduces over hidden slabs.

    Used when the output dtype is not f32: accumulate in an f32 VMEM scratch
    and cast on the last reduction step.
    """
    k = pl.program_id(1)

    @pl.when(k == 0)
    def _init():
        # Fold the fc2 bias into the accumulator init (the write happens anyway).
        acc_ref[...] = jnp.broadcast_to(b2_ref[...], acc_ref.shape)

    # fc1 slab: (tm, C_in) @ (C_in, tk) on the MXU, f32 accumulation.
    h = jnp.dot(x_ref[...], w1_ref[...], preferred_element_type=jnp.float32)
    h = _gelu_exact(h + b1_ref[...])
    # Dropout(p=0.0) -> identity.

    # fc2 partial sum: (tm, tk) @ (tk, C_out), accumulated in f32.
    acc_ref[...] += jnp.dot(h.astype(w2_ref.dtype), w2_ref[...],
                            preferred_element_type=jnp.float32)

    @pl.when(k == pl.num_programs(1) - 1)
    def _finalize():
        o_ref[...] = acc_ref[...].astype(o_ref.dtype)


def _mlp_kernel_f32out(x_ref, w1_ref, b1_ref, w2_ref, b2_ref, o_ref):
    """Same computation, but accumulates directly into the resident f32 output
    tile (its block index is constant across the reduction axis), saving the
    tm*C_out*4 B scratch and the finalize copy pass."""
    k = pl.program_id(1)

    @pl.when(k == 0)
    def _init():
        o_ref[...] = jnp.broadcast_to(b2_ref[...], o_ref.shape)

    h = jnp.dot(x_ref[...], w1_ref[...], preferred_element_type=jnp.float32)
    h = _gelu_exact(h + b1_ref[...])
    o_ref[...] += jnp.dot(h.astype(w2_ref.dtype), w2_ref[...],
                          preferred_element_type=jnp.float32)


# ------------------------ tiling / budget heuristics -------------------------


_GEN_CFG = {
    # default token tile, tile alignment, hidden-slab cap, scoped-VMEM cap,
    # whether the chip has 2 TensorCores sharing the "parallel" grid axis.
    "v5e": dict(tm=256,  align=128, tk_cap=8192, vmem_cap=100 * 2**20, two_tc=False),
    "v6e": dict(tm=1024, align=256, tk_cap=8192, vmem_cap=100 * 2**20, two_tc=False),
    "v7x": dict(tm=512,  align=256, tk_cap=512,  vmem_cap=52 * 2**20,  two_tc=True),
}


def _tpu_generation():
    try:
        kind = jax.devices()[0].device_kind.lower()
    except Exception:
        return "v7x"
    if "v7" in kind or "7x" in kind:
        return "v7x"
    if "v6" in kind:
        return "v6e"
    if "v5" in kind or "v4" in kind:
        return "v5e"   # 128 MiB VMEM class; v5e settings are safe there.
    return "v7x"       # unknown -> most conservative VMEM budget.


def _round_up(x, m):
    return ((x + m - 1) // m) * m


def _ceil_div(a, b):
    return (a + b - 1) // b


def _vmem_estimate(tm, tk, c_in, c_out, cd_isz, out_isz, acc_in_out):
    """Rough per-kernel VMEM footprint (bytes) for the chosen tiles."""
    wslab = 2 * (c_in + c_out) * tk * cd_isz              # double-buffered W1/W2 slabs
    bias = 2 * (tk + c_out) * 4                           # b1 slab + b2 (f32), buffered
    xio = 2 * tm * c_in * cd_isz + 2 * tm * c_out * out_isz  # pipelined x / out tiles
    acc = 0 if acc_in_out else tm * c_out * 4             # f32 scratch accumulator
    interm = tm * tk * (4 + cd_isz)                       # f32 GELU h + bf16 copy for fc2
    return wslab + bias + xio + acc + interm


def _pick_tk(c_hid, c_in, c_out, tm, cd_isz, out_isz, align, tk_cap, budget,
             acc_in_out):
    """Largest hidden-slab size (multiple of `align`, divides c_hid, <= tk_cap)
    whose footprint fits the VMEM budget."""
    if c_hid % 128 != 0:
        return c_hid                     # odd hidden dim: keep the whole axis resident
    gran = align if c_hid % align == 0 else 128
    cap = max(gran, tk_cap)
    cands = [t for t in range(gran, min(c_hid, cap) + 1, gran) if c_hid % t == 0]
    if not cands:
        return c_hid
    best = cands[0]
    for t in cands:
        if t >= best and _vmem_estimate(tm, t, c_in, c_out, cd_isz, out_isz,
                                        acc_in_out) <= budget:
            best = t
    return best


def _choose_tm(M, tm_req, sub, two_tc):
    tm_v = max(sub, (int(tm_req) // sub) * sub)
    if tm_v >= M:
        tm_v = _round_up(M, sub)
    else:
        # Prefer a tile that divides M (avoids the x pad and the output slice),
        # as long as it doesn't shrink the tile by more than 2x.
        best = None
        for cand in range(tm_v, sub - 1, -sub):
            if M % cand == 0:
                best = cand
                break
        if best is not None and best * 2 >= tm_v:
            tm_v = best
    if two_tc and M >= 2 * sub:
        # Keep >= 2 token tiles so both TensorCores get work (v7x).
        tm_v = min(tm_v, _round_up(_ceil_div(M, 2), sub))
    return tm_v


# ------------------------------ wrapper --------------------------------------


def mlp_pallas(x, w1, b1, w2, b2, *, tm=None, tk=None,
               compute_dtype=jnp.bfloat16):
    """x: (B, S, in_features) -> (B, S, out_features)."""
    B, S, C_in = x.shape
    C_hid = w1.shape[1]
    C_out = w2.shape[1]
    assert w1.shape == (C_in, C_hid) and w2.shape == (C_hid, C_out)
    assert b1.shape == (C_hid,) and b2.shape == (C_out,)

    M = B * S
    cd = np.dtype(compute_dtype)
    out_dtype = x.dtype
    out_isz = np.dtype(out_dtype).itemsize
    acc_in_out = np.dtype(out_dtype) == np.dtype(jnp.float32)

    gen = _tpu_generation()
    cfg = _GEN_CFG[gen]

    # Sublane granularity for the token axis (2nd-minor dim of the x block):
    # 16 for 2-byte compute dtype (bf16), 8 for 4-byte, 32 for 1-byte.
    sub = {1: 32, 2: 16}.get(cd.itemsize, 8)

    tm_req = cfg["tm"] if tm is None else int(tm)
    tm_v = _choose_tm(M, tm_req, sub, cfg["two_tc"])

    # Leave headroom below the per-generation cap for Mosaic internal scratch.
    budget = int(cfg["vmem_cap"]) - (6 << 20)
    while True:
        if tk is not None:
            assert C_hid % tk == 0, "tk must divide hidden_features"
            tk_v = int(tk)
        else:
            tk_v = _pick_tk(C_hid, C_in, C_out, tm_v, cd.itemsize, out_isz,
                            cfg["align"], cfg["tk_cap"], budget, acc_in_out)
        est = _vmem_estimate(tm_v, tk_v, C_in, C_out, cd.itemsize, out_isz,
                             acc_in_out)
        if tk is not None or est <= budget or tm_v <= sub:
            break
        tm_v = max(sub, ((tm_v // 2) // sub) * sub)   # shrink token tile and retry

    Mp = _round_up(M, tm_v)

    # MXU operands in bf16 (f32 accumulation inside the kernel);
    # biases stay in f32 so the GELU input stays accurate.
    x2d = x.reshape(M, C_in).astype(cd)
    if Mp != M:
        x2d = jnp.pad(x2d, ((0, Mp - M), (0, 0)))     # padded rows sliced off below
    w1c = w1.astype(cd)
    w2c = w2.astype(cd)
    b1r = b1.reshape(1, C_hid).astype(jnp.float32)
    b2r = b2.reshape(1, C_out).astype(jnp.float32)

    n_k = C_hid // tk_v
    grid = (Mp // tm_v, n_k)

    vmem_limit = int(min(cfg["vmem_cap"],
                         max(int(1.5 * est) + (4 << 20), 16 << 20)))

    in_specs = [
        pl.BlockSpec((tm_v, C_in), lambda i, k: (i, 0)),    # x tile
        pl.BlockSpec((C_in, tk_v), lambda i, k: (0, k)),    # W1 slab
        pl.BlockSpec((1, tk_v), lambda i, k: (0, k)),       # b1 slab
        pl.BlockSpec((tk_v, C_out), lambda i, k: (k, 0)),   # W2 slab
        pl.BlockSpec((1, C_out), lambda i, k: (0, 0)),      # b2
    ]
    out_spec = pl.BlockSpec((tm_v, C_out), lambda i, k: (i, 0))

    if acc_in_out:
        kernel = _mlp_kernel_f32out
        scratch = []
    else:
        kernel = _mlp_kernel_acc
        scratch = [pltpu.VMEM((tm_v, C_out), jnp.float32)]

    out2d = pl.pallas_call(
        kernel,
        out_shape=jax.ShapeDtypeStruct((Mp, C_out), out_dtype),
        grid_spec=pltpu.PrefetchScalarGridSpec(
            num_scalar_prefetch=0,
            grid=grid,
            in_specs=in_specs,
            out_specs=out_spec,
            scratch_shapes=scratch,
        ),
        compiler_params=pltpu.CompilerParams(
            dimension_semantics=("parallel", "arbitrary"),
            vmem_limit_bytes=vmem_limit,
        ),
    )(x2d, w1c, b1r, w2c, b2r)

    if Mp != M:
        out2d = out2d[:M]
    return out2d.reshape(B, S, C_out)


# ------------------------------ reference ------------------------------------


def _init_linear(key, fan_in, fan_out, dtype=jnp.float32):
    """Deterministic init matching nn.Linear's kaiming-uniform scheme.

    Returns (W, b) with W shaped (fan_in, fan_out) (transposed vs. torch).
    """
    kw, kb = jax.random.split(key)
    bound = 1.0 / math.sqrt(fan_in)
    w = jax.random.uniform(kw, (fan_in, fan_out), dtype, -bound, bound)
    b = jax.random.uniform(kb, (fan_out,), dtype, -bound, bound)
    return w, b


def _mlp_reference(x, w1, b1, w2, b2):
    h = jnp.einsum("bsc,ch->bsh", x, w1) + b1
    h = 0.5 * h * (1.0 + jax.lax.erf(h * _INV_SQRT2))
    return jnp.einsum("bsh,ho->bso", h, w2) + b2


if __name__ == "__main__":
    # Small shapes consistent with the module's forward (token MLP); feature
    # dims are 128-multiples so output lane stores are dense.
    B, S = 2, 8
    in_features, hidden_features, out_features = 128, 256, 128

    key = jax.random.PRNGKey(0)
    kx, k1, k2 = jax.random.split(key, 3)

    x = jax.random.normal(kx, (B, S, in_features), jnp.float32)
    w1, b1 = _init_linear(k1, in_features, hidden_features)
    w2, b2 = _init_linear(k2, hidden_features, out_features)

    out = jax.block_until_ready(mlp_pallas(x, w1, b1, w2, b2))

    ref = _mlp_reference(x, w1, b1, w2, b2)
    assert out.shape == (B, S, out_features)
    # bf16 matmul inputs with f32 accumulation vs. an f32 reference.
    err = float(jnp.max(jnp.abs(out.astype(jnp.float32) - ref)))
    assert jnp.allclose(out.astype(jnp.float32), ref, atol=3e-2, rtol=3e-2), (
        f"mismatch vs reference, max abs err = {err}")

    print("KERNEL_OK")
</pallas_src>

<mosaic_0001>
module attributes {stable_mosaic.version = 11 : i64} {
  func.func @_mlp_kernel_f32out(%arg0: i32, %arg1: i32, %arg2: memref<16x128xbf16, #tpu.memory_space<vmem>>, %arg3: memref<128x256xbf16, #tpu.memory_space<vmem>>, %arg4: memref<1x256xf32, #tpu.memory_space<vmem>>, %arg5: memref<256x128xbf16, #tpu.memory_space<vmem>>, %arg6: memref<1x128xf32, #tpu.memory_space<vmem>>, %arg7: memref<16x128xf32, #tpu.memory_space<vmem>>) attributes {dimension_semantics = [#tpu.dimension_semantics<parallel>, #tpu.dimension_semantics<arbitrary>], iteration_bounds = array<i64: 1, 1>, scalar_prefetch = 0 : i64, scratch_operands = 0 : i64, tpu.core_type = #tpu.core_type<tc>, window_params = [{transform_indices = @transform_0, window_bounds = array<i64: 16, 128>}, {transform_indices = @transform_1, window_bounds = array<i64: 128, 256>}, {transform_indices = @transform_2, window_bounds = array<i64: 1, 256>}, {transform_indices = @transform_3, window_bounds = array<i64: 256, 128>}, {pipeline_mode = #tpu.pipeline_mode<synchronous>, transform_indices = @transform_4, window_bounds = array<i64: 1, 128>}, {transform_indices = @transform_5, window_bounds = array<i64: 16, 128>}]} {
    %c0_i32 = arith.constant 0 : i32
    %0 = arith.cmpi eq, %arg1, %c0_i32 : i32
    %1 = arith.extui %0 : i1 to i32
    %c0_i32_0 = arith.constant 0 : i32
    %2 = arith.cmpi ne, %1, %c0_i32_0 : i32
    scf.if %2 {
      %c0_16 = arith.constant 0 : index
      %c0_17 = arith.constant 0 : index
      %23 = vector.load %arg6[%c0_16, %c0_17] : memref<1x128xf32, #tpu.memory_space<vmem>>, vector<1x128xf32>
      %24 = vector.shape_cast %23 : vector<1x128xf32> to vector<1x128xf32>
      %25 = vector.broadcast %24 : vector<1x128xf32> to vector<16x128xf32>
      %c0_18 = arith.constant 0 : index
      %c0_19 = arith.constant 0 : index
      %26 = vector.load %arg7[%c0_18, %c0_19] : memref<16x128xf32, #tpu.memory_space<vmem>>, vector<16x128xf32>
      tpu.vector_store %arg7[%c0_18, %c0_19], %25 {strides = array<i32>} : memref<16x128xf32, #tpu.memory_space<vmem>>, vector<16x128xf32>,
    } else {
    }
    %c0 = arith.constant 0 : index
    %c0_1 = arith.constant 0 : index
    %3 = vector.load %arg2[%c0, %c0_1] : memref<16x128xbf16, #tpu.memory_space<vmem>>, vector<16x128xbf16>
    %c0_2 = arith.constant 0 : index
    %c0_3 = arith.constant 0 : index
    %4 = vector.load %arg3[%c0_2, %c0_3] : memref<128x256xbf16, #tpu.memory_space<vmem>>, vector<128x256xbf16>
    %cst = arith.constant dense<0.000000e+00> : vector<16x256xf32>
    %5 = tpu.matmul %3, %4, %cst {dimension_numbers = #tpu.dot_dimension_numbers<[1], [0], [0], [1], [0, 0, 1, 1], [], []>} : vector<16x128xbf16>, vector<128x256xbf16>, vector<16x256xf32> -> vector<16x256xf32>
    %c0_4 = arith.constant 0 : index
    %c0_5 = arith.constant 0 : index
    %6 = vector.load %arg4[%c0_4, %c0_5] : memref<1x256xf32, #tpu.memory_space<vmem>>, vector<1x256xf32>
    %7 = vector.broadcast %6 : vector<1x256xf32> to vector<16x256xf32>
    %8 = arith.addf %5, %7 : vector<16x256xf32>
    %cst_6 = arith.constant 5.000000e-01 : f32
    %9 = vector.broadcast %cst_6 : f32 to vector<16x256xf32>
    %10 = arith.mulf %9, %8 : vector<16x256xf32>
    %cst_7 = arith.constant 0.707106769 : f32
    %11 = vector.broadcast %cst_7 : f32 to vector<16x256xf32>
    %12 = arith.mulf %8, %11 : vector<16x256xf32>
    %13 = math.erf %12 : vector<16x256xf32>
    %cst_8 = arith.constant 1.000000e+00 : f32
    %14 = vector.broadcast %cst_8 : f32 to vector<16x256xf32>
    %15 = arith.addf %14, %13 : vector<16x256xf32>
    %16 = arith.mulf %10, %15 : vector<16x256xf32>
    %c0_9 = arith.constant 0 : index
    %c0_10 = arith.constant 0 : index
    %17 = vector.load %arg7[%c0_9, %c0_10] : memref<16x128xf32, #tpu.memory_space<vmem>>, vector<16x128xf32>
    %18 = arith.truncf %16 : vector<16x256xf32> to vector<16x256xbf16>
    %c0_11 = arith.constant 0 : index
    %c0_12 = arith.constant 0 : index
    %19 = vector.load %arg5[%c0_11, %c0_12] : memref<256x128xbf16, #tpu.memory_space<vmem>>, vector<256x128xbf16>
    %cst_13 = arith.constant dense<0.000000e+00> : vector<16x128xf32>
    %20 = tpu.matmul %18, %19, %cst_13 {dimension_numbers = #tpu.dot_dimension_numbers<[1], [0], [0], [1], [0, 0, 1, 1], [], []>} : vector<16x256xbf16>, vector<256x128xbf16>, vector<16x128xf32> -> vector<16x128xf32>
    %21 = arith.addf %17, %20 : vector<16x128xf32>
    %c0_14 = arith.constant 0 : index
    %c0_15 = arith.constant 0 : index
    %22 = vector.load %arg7[%c0_14, %c0_15] : memref<16x128xf32, #tpu.memory_space<vmem>>, vector<16x128xf32>
    tpu.vector_store %arg7[%c0_14, %c0_15], %21 {strides = array<i32>} : memref<16x128xf32, #tpu.memory_space<vmem>>, vector<16x128xf32>,
    return
  }
  func.func @transform_0(%arg0: i32, %arg1: i32) -> (i32, i32) {
    %c0_i32 = arith.constant 0 : i32
    %c0_i32_0 = arith.constant 0 : i32
    return %arg0, %c0_i32 : i32, i32
  }
  func.func @transform_1(%arg0: i32, %arg1: i32) -> (i32, i32) {
    %c0_i32 = arith.constant 0 : i32
    %c0_i32_0 = arith.constant 0 : i32
    return %c0_i32, %arg1 : i32, i32
  }
  func.func @transform_2(%arg0: i32, %arg1: i32) -> (i32, i32) {
    %c0_i32 = arith.constant 0 : i32
    %c0_i32_0 = arith.constant 0 : i32
    return %c0_i32, %arg1 : i32, i32
  }
  func.func @transform_3(%arg0: i32, %arg1: i32) -> (i32, i32) {
    %c0_i32 = arith.constant 0 : i32
    %c0_i32_0 = arith.constant 0 : i32
    return %arg1, %c0_i32 : i32, i32
  }
  func.func @transform_4(%arg0: i32, %arg1: i32) -> (i32, i32) {
    %c0_i32 = arith.constant 0 : i32
    %c0_i32_0 = arith.constant 0 : i32
    %c0_i32_1 = arith.constant 0 : i32
    return %c0_i32, %c0_i32_0 : i32, i32
  }
  func.func @transform_5(%arg0: i32, %arg1: i32) -> (i32, i32) {
    %c0_i32 = arith.constant 0 : i32
    %c0_i32_0 = arith.constant 0 : i32
    return %arg0, %c0_i32 : i32, i32
  }
}

</mosaic_0001>

<llo_original>
// kernel: tpu_custom_call.1
$region0: #{tpu_custom_call.1}
  #allocation0 [shape = 'u32[]', space=smem, size = 0x4, offset = 0x4, fixed_abs, tag = 'smem constant byte address 0x4 - core index']
  #allocation1 [shape = 'u32[144,128]{1,0:T(1,128)}', space=vmem, size = 0x12000, scoped, tag = 'internal scratch']
  %s0 = inlined_call_operand.hbm [shape: bf16[16,128], index: 0, kind: input, shape index: {}]
  %s1 = inlined_call_operand.hbm [shape: bf16[128,256], index: 1, kind: input, shape index: {}]
  %s2 = inlined_call_operand.vmem [shape: f32[1,256], index: 2, kind: input, shape index: {}]
  %s3 = inlined_call_operand.hbm [shape: bf16[256,128], index: 3, kind: input, shape index: {}]
  %s4 = inlined_call_operand.vmem [shape: f32[1,128], index: 4, kind: input, shape index: {}]
  %s5 = inlined_call_operand.hbm [shape: f32[16,128], index: 5, kind: output, shape index: {}]
  %s6 = sld [smem:[#allocation0]]
  $region46: #{tpu_custom_call.1} parent=0
    _
  %s8 = ssub.s32 1, %s6
  %s9 = scalar_select 0, %s8, %s6
  $region1: #{tpu_custom_call.1} parent=0
    #allocation2 [shape = 'u8[4096]{0}', space=vmem, size = 0x1000, scoped, tag = 'input window, operand 0, single buffered']
    #allocation3 [shape = 's32[1]{0}', space=sflag, size = 0x4, scoped, tag = 'scoped memory for tpu_custom_call.1']
    #allocation4 [shape = 's32[1]{0}', space=sflag, size = 0x4, scoped, tag = 'scoped memory for tpu_custom_call.1']
    #allocation5 [shape = 'u8[65536]{0}', space=vmem, size = 0x10000, scoped, tag = 'input window, operand 1, single buffered']
    #allocation6 [shape = 's32[1]{0}', space=sflag, size = 0x4, scoped, tag = 'scoped memory for tpu_custom_call.1']
    #allocation7 [shape = 'u8[65536]{0}', space=vmem, size = 0x10000, scoped, tag = 'input window, operand 3, single buffered']
    #allocation8 [shape = 'u8[8192]{0}', space=vmem, size = 0x2000, scoped, tag = 'output window, operand 0, single buffered']
    %10 = vsyncpa [#allocation3], 0
    %11 = vsyncpa [#allocation6], 0
    %12 = vsyncpa [#allocation4], 0
    // Predicated region
    $region2: #{tpu_custom_call.1} parent=1 // pred_check
      _
    $region3: #{tpu_custom_call.1} parent=1 // pred_check_branch
      %14 = sbr.rel (0) target = $region5
    $region4: #{tpu_custom_call.1} parent=1 // pred_region
      %s16 = ssub.s32 128, 128
      %17 = vsyncadd [#allocation3], %s16
      %s18 = sshll.u32 [#allocation2], 4
      %s19 = int_to_ptr.vmem [resolvable:$true] %s18
      %24 = dma.hbm_to_vmem [thread:$0]  %s0, 128, %s19, [#allocation3], 64, 64, 4
    $region5: #{tpu_custom_call.1} parent=1 // pred_fallthru
      _
    // Predicated region
    $region6: #{tpu_custom_call.1} parent=1 // pred_check
      _
    $region7: #{tpu_custom_call.1} parent=1 // pred_check_branch
      %26 = sbr.rel (0) target = $region9
    $region8: #{tpu_custom_call.1} parent=1 // pred_region
      %s28 = ssub.s32 2048, 2048
      %29 = vsyncadd [#allocation6], %s28
      %s30 = sshll.u32 [#allocation5], 4
      %s31 = int_to_ptr.vmem [resolvable:$true] %s30
      %36 = dma.hbm_to_vmem [thread:$0]  %s1, 2048, %s31, [#allocation6], 128, 128, 8
    $region9: #{tpu_custom_call.1} parent=1 // pred_fallthru
      _
    // Predicated region
    $region10: #{tpu_custom_call.1} parent=1 // pred_check
      _
    $region11: #{tpu_custom_call.1} parent=1 // pred_check_branch
      %38 = sbr.rel (0) target = $region13
    $region12: #{tpu_custom_call.1} parent=1 // pred_region
      _
    $region13: #{tpu_custom_call.1} parent=1 // pred_fallthru
      _
    // Predicated region
    $region14: #{tpu_custom_call.1} parent=1 // pred_check
      _
    $region15: #{tpu_custom_call.1} parent=1 // pred_check_branch
      %40 = sbr.rel (0) target = $region17
    $region16: #{tpu_custom_call.1} parent=1 // pred_region
      %s42 = ssub.s32 2048, 2048
      %43 = vsyncadd [#allocation6], %s42
      %s44 = sshll.u32 [#allocation7], 4
      %s45 = int_to_ptr.vmem [resolvable:$true] %s44
      %50 = dma.hbm_to_vmem [thread:$0]  %s3, 2048, %s45, [#allocation6], 64, 64, 4
    $region17: #{tpu_custom_call.1} parent=1 // pred_fallthru
      _
    // Predicated region
    $region18: #{tpu_custom_call.1} parent=1 // pred_check
      _
    $region19: #{tpu_custom_call.1} parent=1 // pred_check_branch
      %52 = sbr.rel (0) target = $region21
    $region20: #{tpu_custom_call.1} parent=1 // pred_region
      _
    $region21: #{tpu_custom_call.1} parent=1 // pred_fallthru
      _
    // Predicated region
    $region22: #{tpu_custom_call.1} parent=1 // pred_check
      _
    $region23: #{tpu_custom_call.1} parent=1 // pred_check_branch
      %54 = sbr.rel (0) target = $region25
    $region24: #{tpu_custom_call.1} parent=1 // pred_region
      %55 = dma.done [#allocation3], 128
    $region25: #{tpu_custom_call.1} parent=1 // pred_fallthru
      _
    // Predicated region
    $region26: #{tpu_custom_call.1} parent=1 // pred_check
      _
    $region27: #{tpu_custom_call.1} parent=1 // pred_check_branch
      %57 = sbr.rel (0) target = $region29
    $region28: #{tpu_custom_call.1} parent=1 // pred_region
      %58 = dma.done [#allocation6], 2048
    $region29: #{tpu_custom_call.1} parent=1 // pred_fallthru
      _
    // Predicated region
    $region30: #{tpu_custom_call.1} parent=1 // pred_check
      _
    $region31: #{tpu_custom_call.1} parent=1 // pred_check_branch
      %60 = sbr.rel (0) target = $region33
    $region32: #{tpu_custom_call.1} parent=1 // pred_region
      %61 = dma.done [#allocation6], 2048
    $region33: #{tpu_custom_call.1} parent=1 // pred_fallthru
      _
    %p63 = scmp.eq.s32.totalorder 0, 0
    // Predicated region
    $region34: #{tpu_custom_call.1} parent=1 // pred_check
      %p64 = pneg %p63
    $region35: #{tpu_custom_call.1} parent=1 // pred_check_branch
      %66 = sbr.rel (%p64) target = $region37
    $region36: #{tpu_custom_call.1} parent=1 // pred_region
      %v67 = vld [vmem:[%s4] sm:$0x1]
      %v69 = vlaneseq
      %v70 = vshrl.u32 %v69, 7
      %v71 = vsub.s32 0, %v70
      %v72 = vrot.slane %v67, %v71
      %74 = vst [vmem:[#allocation8] sm:$0xff] %v72
      %75 = vst [vmem:[#allocation8 + $0x8] sm:$0xff] %v72
    $region37: #{tpu_custom_call.1} parent=1 // pred_fallthru
      _
    %v76 = vld [vmem:[#allocation2] sm:$0xf]
    %v77 = vld [vmem:[#allocation2 + $0x4] sm:$0xf]
    %v78 = vld [vmem:[#allocation5] sm:$0xff]
    %v79 = vld [vmem:[#allocation5 + $0x8] sm:$0xff]
    %v80 = vld [vmem:[#allocation5 + $0x10] sm:$0xff]
    %v81 = vld [vmem:[#allocation5 + $0x18] sm:$0xff]
    %v82 = vld [vmem:[#allocation5 + $0x20] sm:$0xff]
    %v83 = vld [vmem:[#allocation5 + $0x28] sm:$0xff]
    %v84 = vld [vmem:[#allocation5 + $0x30] sm:$0xff]
    %v85 = vld [vmem:[#allocation5 + $0x38] sm:$0xff]
    %v86 = vld [vmem:[#allocation5 + $0x40] sm:$0xff]
    %v87 = vld [vmem:[#allocation5 + $0x48] sm:$0xff]
    %v88 = vld [vmem:[#allocation5 + $0x50] sm:$0xff]
    %v89 = vld [vmem:[#allocation5 + $0x58] sm:$0xff]
    %v90 = vld [vmem:[#allocation5 + $0x60] sm:$0xff]
    %v91 = vld [vmem:[#allocation5 + $0x68] sm:$0xff]
    %v92 = vld [vmem:[#allocation5 + $0x70] sm:$0xff]
    %v93 = vld [vmem:[#allocation5 + $0x78] sm:$0xff]
    %v94 = vld [vmem:[%s2] sm:$0x3]
    %v96 = vlaneseq
    %v97 = vshrl.u32 %v96, 7
    %v98 = vsub.s32 0, %v97
    %v99 = vrot.slane %v94, %v98
    %v100 = vlaneseq
    %v101 = vshrl.u32 %v100, 7
    %v102 = vsub.s32 1, %v101
    %v103 = vrot.slane %v94, %v102
    %v108 = vunpack.c.l.b16 %v76
    %v109 = vunpack.c.l.b16 %v77
    %v110 = vpack.c.b16 %v109, %v108
    %v128 = vunpack.c.l.b16 %v78
    %v129 = vunpack.c.h.b16 %v78
    %v130 = vunpack.c.l.b16 %v79
    %v131 = vunpack.c.h.b16 %v79
    %v132 = vunpack.c.l.b16 %v80
    %v133 = vunpack.c.h.b16 %v80
    %v134 = vunpack.c.l.b16 %v81
    %v135 = vunpack.c.h.b16 %v81
    %v136 = vunpack.c.l.b16 %v82
    %v137 = vunpack.c.h.b16 %v82
    %v138 = vunpack.c.l.b16 %v83
    %v139 = vunpack.c.h.b16 %v83
    %v140 = vunpack.c.l.b16 %v84
    %v141 = vunpack.c.h.b16 %v84
    %v142 = vunpack.c.l.b16 %v85
    %v143 = vunpack.c.h.b16 %v85
    %v144 = vunpack.c.l.b16 %v86
    %v145 = vunpack.c.h.b16 %v86
    %v146 = vunpack.c.l.b16 %v87
    %v147 = vunpack.c.h.b16 %v87
    %v148 = vunpack.c.l.b16 %v88
    %v149 = vunpack.c.h.b16 %v88
    %v150 = vunpack.c.l.b16 %v89
    %v151 = vunpack.c.h.b16 %v89
    %v152 = vunpack.c.l.b16 %v90
    %v153 = vunpack.c.h.b16 %v90
    %v154 = vunpack.c.l.b16 %v91
    %v155 = vunpack.c.h.b16 %v91
    %v156 = vunpack.c.l.b16 %v92
    %v157 = vunpack.c.h.b16 %v92
    %v158 = vunpack.c.l.b16 %v93
    %v159 = vunpack.c.h.b16 %v93
    %v160 = vpack.c.b16 %v130, %v128
    %v161 = vpack.c.b16 %v131, %v129
    %v162 = vpack.c.b16 %v134, %v132
    %v163 = vpack.c.b16 %v135, %v133
    %v164 = vpack.c.b16 %v138, %v136
    %v165 = vpack.c.b16 %v139, %v137
    %v166 = vpack.c.b16 %v142, %v140
    %v167 = vpack.c.b16 %v143, %v141
    %v168 = vpack.c.b16 %v146, %v144
    %v169 = vpack.c.b16 %v147, %v145
    %v170 = vpack.c.b16 %v150, %v148
    %v171 = vpack.c.b16 %v151, %v149
    %v172 = vpack.c.b16 %v154, %v152
    %v173 = vpack.c.b16 %v155, %v153
    %v174 = vpack.c.b16 %v158, %v156
    %v175 = vpack.c.b16 %v159, %v157
    %192 = vmatprep.subr.bf16.mxu0 %v175
    %193 = vmatpush1.bf16.msra.mxu0 %v174
    %194 = vmatprep.subr.bf16.mxu0 %v173
    %195 = vmatpush1.bf16.msra.mxu0 %v172
    %196 = vmatprep.subr.bf16.mxu0 %v171
    %197 = vmatpush1.bf16.msra.mxu0 %v170
    %198 = vmatprep.subr.bf16.mxu0 %v169
    %199 = vmatpush1.bf16.msra.mxu0 %v168
    %200 = vmatprep.subr.bf16.mxu0 %v167
    %201 = vmatpush1.bf16.msra.mxu0 %v166
    %202 = vmatprep.subr.bf16.mxu0 %v165
    %203 = vmatpush1.bf16.msra.mxu0 %v164
    %204 = vmatprep.subr.bf16.mxu0 %v163
    %205 = vmatpush1.bf16.msra.mxu0 %v162
    %206 = vmatprep.subr.bf16.mxu0 %v161
    %207 = vmatpush1.bf16.msra.mxu0 %v160
    %208 = vmatprep.subr.bf16.mxu0 0
    %209 = vmatpush2.bf16.msra.mxu0 0
    %210 = vmatprep.subr.bf16.mxu0 0
    %211 = vmatpush2.bf16.msra.mxu0 0
    %212 = vmatprep.subr.bf16.mxu0 0
    %213 = vmatpush2.bf16.msra.mxu0 0
    %214 = vmatprep.subr.bf16.mxu0 0
    %215 = vmatpush2.bf16.msra.mxu0 0
    %216 = vmatprep.subr.bf16.mxu0 0
    %217 = vmatpush2.bf16.msra.mxu0 0
    %218 = vmatprep.subr.bf16.mxu0 0
    %219 = vmatpush2.bf16.msra.mxu0 0
    %220 = vmatprep.subr.bf16.mxu0 0
    %221 = vmatpush2.bf16.msra.mxu0 0
    %222 = vmatprep.subr.bf16.mxu0 0
    %223 = vmatpush2.bf16.msra.mxu0 0
    %224 = vmatprep.mubr.bf16.mxu0 0
    %225 = vmatmul.mubr.bf16.gmra.mxu0 %v110
    %v226 = vpop.f32.mrf.mxu0
    %v227 = vadd.f32 %v99, %v226
    %v228 = vpop.f32.mrf.mxu0
    %v229 = vadd.f32 %v103, %v228
    %v230 = vpop.f32.mrf.mxu0
    %v231 = vadd.f32 %v99, %v230
    %v232 = vpop.f32.mrf.mxu0
    %v233 = vadd.f32 %v103, %v232
    %234 = vdwg.mxu0
    %v235 = vmul.f32 %v227, 0.5
    %v236 = vmul.f32 %v229, 0.5
    %v237 = vmul.f32 %v231, 0.5
    %v238 = vmul.f32 %v233, 0.5
    %v239 = vmul.f32 %v227, 0.70710677
    %v240 = vmul.f32 %v229, 0.70710677
    %v241 = vmul.f32 %v231, 0.70710677
    %v242 = vmul.f32 %v233, 0.70710677
    %v243 = verf.f32.pop %v239
    %v244 = verf.f32.pop %v240
    %v245 = verf.f32.pop %v241
    %v246 = verf.f32.pop %v242
    %v247 = vadd.f32 %v243, 1.0
    %v248 = vadd.f32 %v244, 1.0
    %v249 = vadd.f32 %v245, 1.0
    %v250 = vadd.f32 %v246, 1.0
    %v251 = vmul.f32 %v235, %v247
    %v252 = vmul.f32 %v236, %v248
    %v253 = vmul.f32 %v237, %v249
    %v254 = vmul.f32 %v238, %v250
    %v255 = vld [vmem:[#allocation8] sm:$0xff]
    %v256 = vld [vmem:[#allocation8 + $0x8] sm:$0xff]
    %v257 = vpack.c.bf16 %v253, %v251
    %v258 = vpack.c.bf16 %v254, %v252
    %v259 = vld [vmem:[#allocation7] sm:$0xf]
    %v260 = vld [vmem:[#allocation7 + $0x4] sm:$0xf]
    %v261 = vld [vmem:[#allocation7 + $0x8] sm:$0xf]
    %v262 = vld [vmem:[#allocation7 + $0xc] sm:$0xf]
    %v263 = vld [vmem:[#allocation7 + $0x10] sm:$0xf]
    %v264 = vld [vmem:[#allocation7 + $0x14] sm:$0xf]
    %v265 = vld [vmem:[#allocation7 + $0x18] sm:$0xf]
    %v266 = vld [vmem:[#allocation7 + $0x1c] sm:$0xf]
    %v267 = vld [vmem:[#allocation7 + $0x20] sm:$0xf]
    %v268 = vld [vmem:[#allocation7 + $0x24] sm:$0xf]
    %v269 = vld [vmem:[#allocation7 + $0x28] sm:$0xf]
    %v270 = vld [vmem:[#allocation7 + $0x2c] sm:$0xf]
    %v271 = vld [vmem:[#allocation7 + $0x30] sm:$0xf]
    %v272 = vld [vmem:[#allocation7 + $0x34] sm:$0xf]
    %v273 = vld [vmem:[#allocation7 + $0x38] sm:$0xf]
    %v274 = vld [vmem:[#allocation7 + $0x3c] sm:$0xf]
    %v275 = vld [vmem:[#allocation7 + $0x40] sm:$0xf]
    %v276 = vld [vmem:[#allocation7 + $0x44] sm:$0xf]
    %v277 = vld [vmem:[#allocation7 + $0x48] sm:$0xf]
    %v278 = vld [vmem:[#allocation7 + $0x4c] sm:$0xf]
    %v279 = vld [vmem:[#allocation7 + $0x50] sm:$0xf]
    %v280 = vld [vmem:[#allocation7 + $0x54] sm:$0xf]
    %v281 = vld [vmem:[#allocation7 + $0x58] sm:$0xf]
    %v282 = vld [vmem:[#allocation7 + $0x5c] sm:$0xf]
    %v283 = vld [vmem:[#allocation7 + $0x60] sm:$0xf]
    %v284 = vld [vmem:[#allocation7 + $0x64] sm:$0xf]
    %v285 = vld [vmem:[#allocation7 + $0x68] sm:$0xf]
    %v286 = vld [vmem:[#allocation7 + $0x6c] sm:$0xf]
    %v287 = vld [vmem:[#allocation7 + $0x70] sm:$0xf]
    %v288 = vld [vmem:[#allocation7 + $0x74] sm:$0xf]
    %v289 = vld [vmem:[#allocation7 + $0x78] sm:$0xf]
    %v290 = vld [vmem:[#allocation7 + $0x7c] sm:$0xf]
    %v323 = vunpack.c.l.b16 %v259
    %v324 = vunpack.c.l.b16 %v260
    %v325 = vunpack.c.l.b16 %v261
    %v326 = vunpack.c.l.b16 %v262
    %v327 = vunpack.c.l.b16 %v263
    %v328 = vunpack.c.l.b16 %v264
    %v329 = vunpack.c.l.b16 %v265
    %v330 = vunpack.c.l.b16 %v266
    %v331 = vunpack.c.l.b16 %v267
    %v332 = vunpack.c.l.b16 %v268
    %v333 = vunpack.c.l.b16 %v269
    %v334 = vunpack.c.l.b16 %v270
    %v335 = vunpack.c.l.b16 %v271
    %v336 = vunpack.c.l.b16 %v272
    %v337 = vunpack.c.l.b16 %v273
    %v338 = vunpack.c.l.b16 %v274
    %v339 = vunpack.c.l.b16 %v275
    %v340 = vunpack.c.l.b16 %v276
    %v341 = vunpack.c.l.b16 %v277
    %v342 = vunpack.c.l.b16 %v278
    %v343 = vunpack.c.l.b16 %v279
    %v344 = vunpack.c.l.b16 %v280
    %v345 = vunpack.c.l.b16 %v281
    %v346 = vunpack.c.l.b16 %v282
    %v347 = vunpack.c.l.b16 %v283
    %v348 = vunpack.c.l.b16 %v284
    %v349 = vunpack.c.l.b16 %v285
    %v350 = vunpack.c.l.b16 %v286
    %v351 = vunpack.c.l.b16 %v287
    %v352 = vunpack.c.l.b16 %v288
    %v353 = vunpack.c.l.b16 %v289
    %v354 = vunpack.c.l.b16 %v290
    %v355 = vpack.c.b16 %v324, %v323
    %v356 = vpack.c.b16 %v326, %v325
    %v357 = vpack.c.b16 %v328, %v327
    %v358 = vpack.c.b16 %v330, %v329
    %v359 = vpack.c.b16 %v332, %v331
    %v360 = vpack.c.b16 %v334, %v333
    %v361 = vpack.c.b16 %v336, %v335
    %v362 = vpack.c.b16 %v338, %v337
    %v363 = vpack.c.b16 %v340, %v339
    %v364 = vpack.c.b16 %v342, %v341
    %v365 = vpack.c.b16 %v344, %v343
    %v366 = vpack.c.b16 %v346, %v345
    %v367 = vpack.c.b16 %v348, %v347
    %v368 = vpack.c.b16 %v350, %v349
    %v369 = vpack.c.b16 %v352, %v351
    %v370 = vpack.c.b16 %v354, %v353
    %387 = vmatprep.subr.bf16.mxu0 0
    %388 = vmatpush1.bf16.msra.mxu0 %v362
    %389 = vmatprep.subr.bf16.mxu0 0
    %390 = vmatpush1.bf16.msra.mxu0 %v361
    %391 = vmatprep.subr.bf16.mxu0 0
    %392 = vmatpush1.bf16.msra.mxu0 %v360
    %393 = vmatprep.subr.bf16.mxu0 0
    %394 = vmatpush1.bf16.msra.mxu0 %v359
    %395 = vmatprep.subr.bf16.mxu0 0
    %396 = vmatpush1.bf16.msra.mxu0 %v358
    %397 = vmatprep.subr.bf16.mxu0 0
    %398 = vmatpush1.bf16.msra.mxu0 %v357
    %399 = vmatprep.subr.bf16.mxu0 0
    %400 = vmatpush1.bf16.msra.mxu0 %v356
    %401 = vmatprep.subr.bf16.mxu0 0
    %402 = vmatpush1.bf16.msra.mxu0 %v355
    %403 = vmatprep.subr.bf16.mxu0 0
    %404 = vmatpush2.bf16.msra.mxu0 %v370
    %405 = vmatprep.subr.bf16.mxu0 0
    %406 = vmatpush2.bf16.msra.mxu0 %v369
    %407 = vmatprep.subr.bf16.mxu0 0
    %408 = vmatpush2.bf16.msra.mxu0 %v368
    %409 = vmatprep.subr.bf16.mxu0 0
    %410 = vmatpush2.bf16.msra.mxu0 %v367
    %411 = vmatprep.subr.bf16.mxu0 0
    %412 = vmatpush2.bf16.msra.mxu0 %v366
    %413 = vmatprep.subr.bf16.mxu0 0
    %414 = vmatpush2.bf16.msra.mxu0 %v365
    %415 = vmatprep.subr.bf16.mxu0 0
    %416 = vmatpush2.bf16.msra.mxu0 %v364
    %417 = vmatprep.subr.bf16.mxu0 0
    %418 = vmatpush2.bf16.msra.mxu0 %v363
    %419 = vmatprep.mubr.bf16.mxu0 %v258
    %420 = vmatmul.mubr.bf16.gmra.mxu0 %v257
    %v421 = vpop.f32.mrf.mxu0
    %v422 = vadd.f32 0.0, %v421
    %v423 = vpop.f32.mrf.mxu0
    %v424 = vpop.f32.mrf.mxu0
    %v425 = vadd.f32 0.0, %v424
    %v426 = vpop.f32.mrf.mxu0
    %427 = vdwg.mxu0
    %v428 = vadd.f32 %v255, %v422
    %v429 = vadd.f32 %v256, %v425
    %430 = vst [vmem:[#allocation8] sm:$0xff] %v428
    %431 = vst [vmem:[#allocation8 + $0x8] sm:$0xff] %v429
    // Predicated region
    $region38: #{tpu_custom_call.1} parent=1 // pred_check
      _
    $region39: #{tpu_custom_call.1} parent=1 // pred_check_branch
      %433 = sbr.rel (0) target = $region41
    $region40: #{tpu_custom_call.1} parent=1 // pred_region
      %s435 = ssub.s32 256, 256
      %436 = vsyncadd [#allocation4], %s435
      %s437 = sshll.u32 [#allocation8], 4
      %s438 = int_to_ptr.vmem [resolvable:$true] %s437
      %443 = dma.vmem_to_hbm [thread:$0]  %s438, 256, %s5, [#allocation4], 128, 128, 8
    $region41: #{tpu_custom_call.1} parent=1 // pred_fallthru
      _
    // Predicated region
    $region42: #{tpu_custom_call.1} parent=1 // pred_check
      _
    $region43: #{tpu_custom_call.1} parent=1 // pred_check_branch
      %445 = sbr.rel (0) target = $region45
    $region44: #{tpu_custom_call.1} parent=1 // pred_region
      %446 = dma.done [#allocation4], 256
    $region45: #{tpu_custom_call.1} parent=1 // pred_fallthru
      _
    %447 = vsyncpa [#allocation3], 1
    %448 = vsyncpa [#allocation6], 1
    %449 = vsyncpa [#allocation4], 1

</llo_original>
